<compile_context>
chip_gen: v6e
topology: v6e:2x2x1
jax: 0.10.0
libtpu: 0.0.40
codegen_flags: <defaults>
</compile_context>

<pallas_src>
import jax
import jax.numpy as jnp
from jax.experimental import pallas as pl
from jax.experimental.pallas import tpu as pltpu


# ----------------------------------------------------------------------------
# Fused Pallas kernel: one batch tile (NB images) per grid step.
# ----------------------------------------------------------------------------
def fused_resblock_kernel(x_ref, wb1_ref, bt1_ref, wb2_ref, bt2_ref, o_ref,
                          xpad_ref, h1pad_ref):
    # x_ref:   (NB, H, W*Cin)       lane-dense input slab (also the residual)
    # wb1_ref: (3, W*Cin, W*Cout)   banded conv1 weights (BN1 scale folded), bf16
    # wb2_ref: (3, W*Cout, W*Cout)  banded conv2 weights (BN2 scale folded), bf16
    # bt1_ref, bt2_ref: (1, W*Cout) folded BN biases tiled along lanes, f32
    # o_ref:   (NB, H, W*Cout)      lane-dense output slab
    # xpad_ref/h1pad_ref: (NB, H+2, W*C) f32 scratch with a 1-row zero halo in H
    nb, h, wcin = x_ref.shape
    wcout = o_ref.shape[-1]
    m = nb * h

    x = x_ref[...].astype(jnp.float32)                     # (NB, H, W*Cin)

    def fill(pad_ref, interior):
        # Zero ONLY the 1-row halos; the interior is fully overwritten every
        # step.  Not gated on program_id -> safe when the grid axis is sharded
        # across TensorCores (each core has its own scratch).
        wc = pad_ref.shape[-1]
        pad_ref[:, 0:1, :] = jnp.zeros((nb, 1, wc), jnp.float32)
        pad_ref[:, h + 1:h + 2, :] = jnp.zeros((nb, 1, wc), jnp.float32)
        pad_ref[:, 1:h + 1, :] = interior

    def conv3x3(pad_ref, wb_ref):
        # 3 accumulating MXU matmuls on lane-dense rows.  W-direction zero
        # padding is baked into the banded weights; H padding comes from the
        # scratch halo.  Taps are ref slices (only one tap live at a time).
        kdim = pad_ref.shape[-1]
        acc = None
        for dy in range(3):
            tap = pad_ref[:, dy:dy + h, :].reshape(m, kdim).astype(wb_ref.dtype)
            p = jnp.dot(tap, wb_ref[dy], preferred_element_type=jnp.float32)
            acc = p if acc is None else acc + p
        return acc                                          # (M, W*Cout) f32

    # conv1 -> (folded) BN1 -> ReLU, stays in VMEM.
    fill(xpad_ref, x)
    h1 = jnp.maximum(conv3x3(xpad_ref, wb1_ref) + bt1_ref[...], 0.0)

    # conv2 -> (folded) BN2 -> + identity residual -> ReLU (all lane-dense).
    fill(h1pad_ref, h1.reshape(nb, h, wcout))
    y = conv3x3(h1pad_ref, wb2_ref) + bt2_ref[...] + x.reshape(m, wcin)
    o_ref[...] = jnp.maximum(y, 0.0).reshape(nb, h, wcout).astype(o_ref.dtype)


# ----------------------------------------------------------------------------
# Wrapper: BN folding, banded-weight construction, grid / BlockSpec plumbing.
# ----------------------------------------------------------------------------
def _banded_weights(w_hwio, scale, w_sp, dtype=jnp.bfloat16):
    """Fold BN scale into HWIO conv weights and build per-dy banded matrices.

    Wband[dy, wp*Cin + ci, w*Cout + co] = (w * scale)[dy, wp - w + 1, ci, co]
    when 0 <= wp - w + 1 <= 2, else 0 (so zero padding in W is baked in).
    """
    kh, kw, cin, cout = w_hwio.shape
    wf = w_hwio * scale.reshape(1, 1, 1, cout)
    wp = jnp.arange(w_sp)[:, None]                 # input column index
    wo = jnp.arange(w_sp)[None, :]                 # output column index
    dx = wp - wo + 1                               # (W, W)
    valid = ((dx >= 0) & (dx < kw))[..., None, None]
    dxc = jnp.clip(dx, 0, kw - 1)
    bands = []
    for dy in range(kh):
        blk = wf[dy][dxc] * valid                  # (W, W, Cin, Cout): [wp, w, ci, co]
        bands.append(blk.transpose(0, 2, 1, 3).reshape(w_sp * cin, w_sp * cout))
    return jnp.stack(bands, axis=0).astype(dtype)  # (3, W*Cin, W*Cout)


def residual_block_forward(x_nhwc, params, mxu_dtype=jnp.bfloat16):
    """ResidualBlock forward. x_nhwc: (N, H, W, Cin); stride=1, identity shortcut."""
    w1, s1, b1, w2, s2, b2 = params
    n, h, w, cin = x_nhwc.shape
    cout = w1.shape[-1]
    assert cin == cout, "identity shortcut requires inchannel == outchannel"
    wcin, wcout = w * cin, w * cout
    # Best perf when w*cout is a multiple of 128 (fully lane-dense, unmasked
    # stores); other widths still run, just with masked partial stores.

    wb1 = _banded_weights(w1, s1.reshape(-1), w, mxu_dtype)   # (3, W*Cin, W*Cout)
    wb2 = _banded_weights(w2, s2.reshape(-1), w, mxu_dtype)   # (3, W*Cout, W*Cout)
    bt1 = jnp.tile(b1.reshape(-1), w).reshape(1, wcout).astype(jnp.float32)
    bt2 = jnp.tile(b2.reshape(-1), w).reshape(1, wcout).astype(jnp.float32)

    x_dense = x_nhwc.reshape(n, h, wcin)                      # lane-dense input

    # Batch folding: two grid steps keep both v7x TensorCores busy while costing
    # only one extra ~0.35us step on single-TC v5e/v6e.
    nb = n // 2 if (n % 2 == 0 and n >= 2) else n
    grid = (n // nb,)

    itemsize = x_dense.dtype.itemsize
    blk_bytes = (2 * nb * h * wcin * itemsize                 # x blocks (double buffered)
                 + 2 * nb * h * wcout * itemsize              # out blocks
                 + 2 * (wb1.size + wb2.size) * wb1.dtype.itemsize
                 + 2 * (bt1.size + bt2.size) * 4
                 + nb * (h + 2) * (wcin + wcout) * 4)         # scratches
    vmem_limit = int(2 * blk_bytes + (4 << 20))               # actual bytes + headroom

    cost = pl.CostEstimate(
        flops=2 * 3 * 2 * n * h * wcin * wcout,               # 2 convs x 3 taps x 2MKN
        transcendentals=0,
        bytes_accessed=int(x_dense.size * itemsize + n * h * wcout * itemsize
                           + (wb1.size + wb2.size) * wb1.dtype.itemsize),
    )

    out_dense = pl.pallas_call(
        fused_resblock_kernel,
        out_shape=jax.ShapeDtypeStruct((n, h, wcout), x_nhwc.dtype),
        grid=grid,
        in_specs=[
            pl.BlockSpec((nb, h, wcin), lambda i: (i, 0, 0)),
            pl.BlockSpec((3, wcin, wcout), lambda i: (0, 0, 0)),
            pl.BlockSpec((1, wcout), lambda i: (0, 0)),
            pl.BlockSpec((3, wcout, wcout), lambda i: (0, 0, 0)),
            pl.BlockSpec((1, wcout), lambda i: (0, 0)),
        ],
        out_specs=pl.BlockSpec((nb, h, wcout), lambda i: (i, 0, 0)),
        scratch_shapes=[
            pltpu.VMEM((nb, h + 2, wcin), jnp.float32),
            pltpu.VMEM((nb, h + 2, wcout), jnp.float32),
        ],
        compiler_params=pltpu.CompilerParams(
            dimension_semantics=("parallel",),
            vmem_limit_bytes=vmem_limit,
        ),
        cost_estimate=cost,
    )(x_dense, wb1, bt1, wb2, bt2)

    return out_dense.reshape(n, h, w, cout)


# ----------------------------------------------------------------------------
# Deterministic parameter construction (synthetic, no checkpoint).
# ----------------------------------------------------------------------------
def make_params(key, cin, cout, eps=1e-5):
    ks = jax.random.split(key, 10)
    # Conv weights stored in HWIO layout (3, 3, Cin, Cout), bias=False.
    w1 = 0.1 * jax.random.normal(ks[0], (3, 3, cin, cout), jnp.float32)
    w2 = 0.1 * jax.random.normal(ks[1], (3, 3, cout, cout), jnp.float32)

    def bn(kg, kb, km, kv):
        gamma = 1.0 + 0.1 * jax.random.normal(kg, (cout,), jnp.float32)
        beta = 0.1 * jax.random.normal(kb, (cout,), jnp.float32)
        mean = 0.1 * jax.random.normal(km, (cout,), jnp.float32)
        var = 1.0 + 0.1 * jnp.abs(jax.random.normal(kv, (cout,), jnp.float32))
        scale = gamma / jnp.sqrt(var + eps)
        bias = beta - mean * scale
        return scale.reshape(1, cout), bias.reshape(1, cout)

    s1, b1 = bn(ks[2], ks[3], ks[4], ks[5])
    s2, b2 = bn(ks[6], ks[7], ks[8], ks[9])
    return (w1, s1, b1, w2, s2, b2)


# ----------------------------------------------------------------------------
# Pure-JAX reference (for correctness check).
# ----------------------------------------------------------------------------
def reference_forward(x_nhwc, params):
    w1, s1, b1, w2, s2, b2 = params
    dn = ("NHWC", "HWIO", "NHWC")
    pad = ((1, 1), (1, 1))
    y = jax.lax.conv_general_dilated(x_nhwc, w1, (1, 1), pad, dimension_numbers=dn)
    y = jnp.maximum(y * s1.reshape(1, 1, 1, -1) + b1.reshape(1, 1, 1, -1), 0.0)
    y = jax.lax.conv_general_dilated(y, w2, (1, 1), pad, dimension_numbers=dn)
    y = y * s2.reshape(1, 1, 1, -1) + b2.reshape(1, 1, 1, -1) + x_nhwc
    return jnp.maximum(y, 0.0)


if __name__ == "__main__":
    key = jax.random.PRNGKey(0)
    k_x, k_p = jax.random.split(key)

    N, C, H, W = 2, 8, 16, 16            # W*C = 128 -> fully lane-dense slabs
    x_nchw = jax.random.normal(k_x, (N, C, H, W), jnp.float32)
    x_nhwc = jnp.transpose(x_nchw, (0, 2, 3, 1))   # NCHW -> NHWC (channels lane-minor)

    params = make_params(k_p, C, C)

    out = jax.block_until_ready(residual_block_forward(x_nhwc, params))
    ref = reference_forward(x_nhwc, params)

    assert out.shape == (N, H, W, C)
    # bf16 MXU operands (f32 accumulation + f32 epilogue) -> bf16-level tolerance.
    assert jnp.allclose(out, ref, atol=2e-2, rtol=2e-2), (
        f"max abs diff {jnp.max(jnp.abs(out - ref))}")

    print("KERNEL_OK")
</pallas_src>

<mosaic_0001>
module attributes {stable_mosaic.version = 11 : i64} {
  func.func @fused_resblock_kernel(%arg0: i32, %arg1: memref<1x16x128xf32, #tpu.memory_space<vmem>>, %arg2: memref<3x128x128xbf16, #tpu.memory_space<vmem>>, %arg3: memref<1x128xf32, #tpu.memory_space<vmem>>, %arg4: memref<3x128x128xbf16, #tpu.memory_space<vmem>>, %arg5: memref<1x128xf32, #tpu.memory_space<vmem>>, %arg6: memref<1x16x128xf32, #tpu.memory_space<vmem>>, %arg7: memref<1x18x128xf32, #tpu.memory_space<vmem>>, %arg8: memref<1x18x128xf32, #tpu.memory_space<vmem>>) attributes {dimension_semantics = [#tpu.dimension_semantics<parallel>], iteration_bounds = array<i64: 2>, scalar_prefetch = 0 : i64, scratch_operands = 2 : i64, tpu.core_type = #tpu.core_type<tc>, window_params = [{transform_indices = @transform_0, window_bounds = array<i64: 1, 16, 128>}, {pipeline_mode = #tpu.pipeline_mode<synchronous>, transform_indices = @transform_1, window_bounds = array<i64: 3, 128, 128>}, {pipeline_mode = #tpu.pipeline_mode<synchronous>, transform_indices = @transform_2, window_bounds = array<i64: 1, 128>}, {pipeline_mode = #tpu.pipeline_mode<synchronous>, transform_indices = @transform_3, window_bounds = array<i64: 3, 128, 128>}, {pipeline_mode = #tpu.pipeline_mode<synchronous>, transform_indices = @transform_4, window_bounds = array<i64: 1, 128>}, {transform_indices = @transform_5, window_bounds = array<i64: 1, 16, 128>}]} {
    %c0 = arith.constant 0 : index
    %c0_0 = arith.constant 0 : index
    %c0_1 = arith.constant 0 : index
    %0 = vector.load %arg1[%c0, %c0_0, %c0_1] : memref<1x16x128xf32, #tpu.memory_space<vmem>>, vector<1x16x128xf32>
    %cst = arith.constant 0.000000e+00 : f32
    %1 = vector.broadcast %cst : f32 to vector<1x1x128xf32>
    %c0_2 = arith.constant 0 : index
    %c0_3 = arith.constant 0 : index
    %c0_4 = arith.constant 0 : index
    %2 = vector.load %arg7[%c0_2, %c0_3, %c0_4] : memref<1x18x128xf32, #tpu.memory_space<vmem>>, vector<1x1x128xf32>
    tpu.vector_store %arg7[%c0_2, %c0_3, %c0_4], %1 {strides = array<i32>} : memref<1x18x128xf32, #tpu.memory_space<vmem>>, vector<1x1x128xf32>,
    %cst_5 = arith.constant 0.000000e+00 : f32
    %3 = vector.broadcast %cst_5 : f32 to vector<1x1x128xf32>
    %c0_6 = arith.constant 0 : index
    %c17 = arith.constant 17 : index
    %c0_7 = arith.constant 0 : index
    %4 = vector.load %arg7[%c0_6, %c17, %c0_7] : memref<1x18x128xf32, #tpu.memory_space<vmem>>, vector<1x1x128xf32>
    tpu.vector_store %arg7[%c0_6, %c17, %c0_7], %3 {strides = array<i32>} : memref<1x18x128xf32, #tpu.memory_space<vmem>>, vector<1x1x128xf32>,
    %c0_8 = arith.constant 0 : index
    %c1 = arith.constant 1 : index
    %c0_9 = arith.constant 0 : index
    %5 = vector.load %arg7[%c0_8, %c1, %c0_9] : memref<1x18x128xf32, #tpu.memory_space<vmem>>, vector<1x16x128xf32>
    tpu.vector_store %arg7[%c0_8, %c1, %c0_9], %0 {strides = array<i32>} : memref<1x18x128xf32, #tpu.memory_space<vmem>>, vector<1x16x128xf32>,
    %c0_10 = arith.constant 0 : index
    %c0_11 = arith.constant 0 : index
    %c0_12 = arith.constant 0 : index
    %6 = vector.load %arg7[%c0_10, %c0_11, %c0_12] : memref<1x18x128xf32, #tpu.memory_space<vmem>>, vector<1x16x128xf32>
    %7 = vector.shape_cast %6 : vector<1x16x128xf32> to vector<16x128xf32>
    %8 = arith.truncf %7 : vector<16x128xf32> to vector<16x128xbf16>
    %c0_13 = arith.constant 0 : index
    %c0_14 = arith.constant 0 : index
    %c0_15 = arith.constant 0 : index
    %9 = vector.load %arg2[%c0_13, %c0_14, %c0_15] : memref<3x128x128xbf16, #tpu.memory_space<vmem>>, vector<1x128x128xbf16>
    %10 = vector.shape_cast %9 : vector<1x128x128xbf16> to vector<128x128xbf16>
    %cst_16 = arith.constant dense<0.000000e+00> : vector<16x128xf32>
    %11 = tpu.matmul %8, %10, %cst_16 {dimension_numbers = #tpu.dot_dimension_numbers<[1], [0], [0], [1], [0, 0, 1, 1], [], []>} : vector<16x128xbf16>, vector<128x128xbf16>, vector<16x128xf32> -> vector<16x128xf32>
    %c0_17 = arith.constant 0 : index
    %c1_18 = arith.constant 1 : index
    %c0_19 = arith.constant 0 : index
    %12 = vector.load %arg7[%c0_17, %c1_18, %c0_19] : memref<1x18x128xf32, #tpu.memory_space<vmem>>, vector<1x16x128xf32>
    %13 = vector.shape_cast %12 : vector<1x16x128xf32> to vector<16x128xf32>
    %14 = arith.truncf %13 : vector<16x128xf32> to vector<16x128xbf16>
    %c1_20 = arith.constant 1 : index
    %c0_21 = arith.constant 0 : index
    %c0_22 = arith.constant 0 : index
    %15 = vector.load %arg2[%c1_20, %c0_21, %c0_22] : memref<3x128x128xbf16, #tpu.memory_space<vmem>>, vector<1x128x128xbf16>
    %16 = vector.shape_cast %15 : vector<1x128x128xbf16> to vector<128x128xbf16>
    %cst_23 = arith.constant dense<0.000000e+00> : vector<16x128xf32>
    %17 = tpu.matmul %14, %16, %cst_23 {dimension_numbers = #tpu.dot_dimension_numbers<[1], [0], [0], [1], [0, 0, 1, 1], [], []>} : vector<16x128xbf16>, vector<128x128xbf16>, vector<16x128xf32> -> vector<16x128xf32>
    %18 = arith.addf %11, %17 : vector<16x128xf32>
    %c0_24 = arith.constant 0 : index
    %c2 = arith.constant 2 : index
    %c0_25 = arith.constant 0 : index
    %19 = vector.load %arg7[%c0_24, %c2, %c0_25] : memref<1x18x128xf32, #tpu.memory_space<vmem>>, vector<1x16x128xf32>
    %20 = vector.shape_cast %19 : vector<1x16x128xf32> to vector<16x128xf32>
    %21 = arith.truncf %20 : vector<16x128xf32> to vector<16x128xbf16>
    %c2_26 = arith.constant 2 : index
    %c0_27 = arith.constant 0 : index
    %c0_28 = arith.constant 0 : index
    %22 = vector.load %arg2[%c2_26, %c0_27, %c0_28] : memref<3x128x128xbf16, #tpu.memory_space<vmem>>, vector<1x128x128xbf16>
    %23 = vector.shape_cast %22 : vector<1x128x128xbf16> to vector<128x128xbf16>
    %cst_29 = arith.constant dense<0.000000e+00> : vector<16x128xf32>
    %24 = tpu.matmul %21, %23, %cst_29 {dimension_numbers = #tpu.dot_dimension_numbers<[1], [0], [0], [1], [0, 0, 1, 1], [], []>} : vector<16x128xbf16>, vector<128x128xbf16>, vector<16x128xf32> -> vector<16x128xf32>
    %25 = arith.addf %18, %24 : vector<16x128xf32>
    %c0_30 = arith.constant 0 : index
    %c0_31 = arith.constant 0 : index
    %26 = vector.load %arg3[%c0_30, %c0_31] : memref<1x128xf32, #tpu.memory_space<vmem>>, vector<1x128xf32>
    %27 = vector.broadcast %26 : vector<1x128xf32> to vector<16x128xf32>
    %28 = arith.addf %25, %27 : vector<16x128xf32>
    %cst_32 = arith.constant 0.000000e+00 : f32
    %29 = vector.broadcast %cst_32 : f32 to vector<16x128xf32>
    %30 = arith.maximumf %28, %29 : vector<16x128xf32>
    %31 = vector.shape_cast %30 : vector<16x128xf32> to vector<1x16x128xf32>
    %cst_33 = arith.constant 0.000000e+00 : f32
    %32 = vector.broadcast %cst_33 : f32 to vector<1x1x128xf32>
    %c0_34 = arith.constant 0 : index
    %c0_35 = arith.constant 0 : index
    %c0_36 = arith.constant 0 : index
    %33 = vector.load %arg8[%c0_34, %c0_35, %c0_36] : memref<1x18x128xf32, #tpu.memory_space<vmem>>, vector<1x1x128xf32>
    tpu.vector_store %arg8[%c0_34, %c0_35, %c0_36], %32 {strides = array<i32>} : memref<1x18x128xf32, #tpu.memory_space<vmem>>, vector<1x1x128xf32>,
    %cst_37 = arith.constant 0.000000e+00 : f32
    %34 = vector.broadcast %cst_37 : f32 to vector<1x1x128xf32>
    %c0_38 = arith.constant 0 : index
    %c17_39 = arith.constant 17 : index
    %c0_40 = arith.constant 0 : index
    %35 = vector.load %arg8[%c0_38, %c17_39, %c0_40] : memref<1x18x128xf32, #tpu.memory_space<vmem>>, vector<1x1x128xf32>
    tpu.vector_store %arg8[%c0_38, %c17_39, %c0_40], %34 {strides = array<i32>} : memref<1x18x128xf32, #tpu.memory_space<vmem>>, vector<1x1x128xf32>,
    %c0_41 = arith.constant 0 : index
    %c1_42 = arith.constant 1 : index
    %c0_43 = arith.constant 0 : index
    %36 = vector.load %arg8[%c0_41, %c1_42, %c0_43] : memref<1x18x128xf32, #tpu.memory_space<vmem>>, vector<1x16x128xf32>
    tpu.vector_store %arg8[%c0_41, %c1_42, %c0_43], %31 {strides = array<i32>} : memref<1x18x128xf32, #tpu.memory_space<vmem>>, vector<1x16x128xf32>,
    %c0_44 = arith.constant 0 : index
    %c0_45 = arith.constant 0 : index
    %c0_46 = arith.constant 0 : index
    %37 = vector.load %arg8[%c0_44, %c0_45, %c0_46] : memref<1x18x128xf32, #tpu.memory_space<vmem>>, vector<1x16x128xf32>
    %38 = vector.shape_cast %37 : vector<1x16x128xf32> to vector<16x128xf32>
    %39 = arith.truncf %38 : vector<16x128xf32> to vector<16x128xbf16>
    %c0_47 = arith.constant 0 : index
    %c0_48 = arith.constant 0 : index
    %c0_49 = arith.constant 0 : index
    %40 = vector.load %arg4[%c0_47, %c0_48, %c0_49] : memref<3x128x128xbf16, #tpu.memory_space<vmem>>, vector<1x128x128xbf16>
    %41 = vector.shape_cast %40 : vector<1x128x128xbf16> to vector<128x128xbf16>
    %cst_50 = arith.constant dense<0.000000e+00> : vector<16x128xf32>
    %42 = tpu.matmul %39, %41, %cst_50 {dimension_numbers = #tpu.dot_dimension_numbers<[1], [0], [0], [1], [0, 0, 1, 1], [], []>} : vector<16x128xbf16>, vector<128x128xbf16>, vector<16x128xf32> -> vector<16x128xf32>
    %c0_51 = arith.constant 0 : index
    %c1_52 = arith.constant 1 : index
    %c0_53 = arith.constant 0 : index
    %43 = vector.load %arg8[%c0_51, %c1_52, %c0_53] : memref<1x18x128xf32, #tpu.memory_space<vmem>>, vector<1x16x128xf32>
    %44 = vector.shape_cast %43 : vector<1x16x128xf32> to vector<16x128xf32>
    %45 = arith.truncf %44 : vector<16x128xf32> to vector<16x128xbf16>
    %c1_54 = arith.constant 1 : index
    %c0_55 = arith.constant 0 : index
    %c0_56 = arith.constant 0 : index
    %46 = vector.load %arg4[%c1_54, %c0_55, %c0_56] : memref<3x128x128xbf16, #tpu.memory_space<vmem>>, vector<1x128x128xbf16>
    %47 = vector.shape_cast %46 : vector<1x128x128xbf16> to vector<128x128xbf16>
    %cst_57 = arith.constant dense<0.000000e+00> : vector<16x128xf32>
    %48 = tpu.matmul %45, %47, %cst_57 {dimension_numbers = #tpu.dot_dimension_numbers<[1], [0], [0], [1], [0, 0, 1, 1], [], []>} : vector<16x128xbf16>, vector<128x128xbf16>, vector<16x128xf32> -> vector<16x128xf32>
    %49 = arith.addf %42, %48 : vector<16x128xf32>
    %c0_58 = arith.constant 0 : index
    %c2_59 = arith.constant 2 : index
    %c0_60 = arith.constant 0 : index
    %50 = vector.load %arg8[%c0_58, %c2_59, %c0_60] : memref<1x18x128xf32, #tpu.memory_space<vmem>>, vector<1x16x128xf32>
    %51 = vector.shape_cast %50 : vector<1x16x128xf32> to vector<16x128xf32>
    %52 = arith.truncf %51 : vector<16x128xf32> to vector<16x128xbf16>
    %c2_61 = arith.constant 2 : index
    %c0_62 = arith.constant 0 : index
    %c0_63 = arith.constant 0 : index
    %53 = vector.load %arg4[%c2_61, %c0_62, %c0_63] : memref<3x128x128xbf16, #tpu.memory_space<vmem>>, vector<1x128x128xbf16>
    %54 = vector.shape_cast %53 : vector<1x128x128xbf16> to vector<128x128xbf16>
    %cst_64 = arith.constant dense<0.000000e+00> : vector<16x128xf32>
    %55 = tpu.matmul %52, %54, %cst_64 {dimension_numbers = #tpu.dot_dimension_numbers<[1], [0], [0], [1], [0, 0, 1, 1], [], []>} : vector<16x128xbf16>, vector<128x128xbf16>, vector<16x128xf32> -> vector<16x128xf32>
    %56 = arith.addf %49, %55 : vector<16x128xf32>
    %c0_65 = arith.constant 0 : index
    %c0_66 = arith.constant 0 : index
    %57 = vector.load %arg5[%c0_65, %c0_66] : memref<1x128xf32, #tpu.memory_space<vmem>>, vector<1x128xf32>
    %58 = vector.broadcast %57 : vector<1x128xf32> to vector<16x128xf32>
    %59 = arith.addf %56, %58 : vector<16x128xf32>
    %60 = vector.shape_cast %0 : vector<1x16x128xf32> to vector<16x128xf32>
    %61 = arith.addf %59, %60 : vector<16x128xf32>
    %cst_67 = arith.constant 0.000000e+00 : f32
    %62 = vector.broadcast %cst_67 : f32 to vector<16x128xf32>
    %63 = arith.maximumf %61, %62 : vector<16x128xf32>
    %64 = vector.shape_cast %63 : vector<16x128xf32> to vector<1x16x128xf32>
    %c0_68 = arith.constant 0 : index
    %c0_69 = arith.constant 0 : index
    %c0_70 = arith.constant 0 : index
    %65 = vector.load %arg6[%c0_68, %c0_69, %c0_70] : memref<1x16x128xf32, #tpu.memory_space<vmem>>, vector<1x16x128xf32>
    tpu.vector_store %arg6[%c0_68, %c0_69, %c0_70], %64 {strides = array<i32>} : memref<1x16x128xf32, #tpu.memory_space<vmem>>, vector<1x16x128xf32>,
    return
  }
  func.func @transform_0(%arg0: i32) -> (i32, i32, i32) {
    %c0_i32 = arith.constant 0 : i32
    %c0_i32_0 = arith.constant 0 : i32
    %c0_i32_1 = arith.constant 0 : i32
    return %arg0, %c0_i32, %c0_i32_0 : i32, i32, i32
  }
  func.func @transform_1(%arg0: i32) -> (i32, i32, i32) {
    %c0_i32 = arith.constant 0 : i32
    %c0_i32_0 = arith.constant 0 : i32
    %c0_i32_1 = arith.constant 0 : i32
    %c0_i32_2 = arith.constant 0 : i32
    return %c0_i32, %c0_i32_0, %c0_i32_1 : i32, i32, i32
  }
  func.func @transform_2(%arg0: i32) -> (i32, i32) {
    %c0_i32 = arith.constant 0 : i32
    %c0_i32_0 = arith.constant 0 : i32
    %c0_i32_1 = arith.constant 0 : i32
    return %c0_i32, %c0_i32_0 : i32, i32
  }
  func.func @transform_3(%arg0: i32) -> (i32, i32, i32) {
    %c0_i32 = arith.constant 0 : i32
    %c0_i32_0 = arith.constant 0 : i32
    %c0_i32_1 = arith.constant 0 : i32
    %c0_i32_2 = arith.constant 0 : i32
    return %c0_i32, %c0_i32_0, %c0_i32_1 : i32, i32, i32
  }
  func.func @transform_4(%arg0: i32) -> (i32, i32) {
    %c0_i32 = arith.constant 0 : i32
    %c0_i32_0 = arith.constant 0 : i32
    %c0_i32_1 = arith.constant 0 : i32
    return %c0_i32, %c0_i32_0 : i32, i32
  }
  func.func @transform_5(%arg0: i32) -> (i32, i32, i32) {
    %c0_i32 = arith.constant 0 : i32
    %c0_i32_0 = arith.constant 0 : i32
    %c0_i32_1 = arith.constant 0 : i32
    return %arg0, %c0_i32, %c0_i32_0 : i32, i32, i32
  }
}

</mosaic_0001>

<llo_original>
// kernel: tpu_custom_call.1
$region0: #{tpu_custom_call.1}
  #allocation0 [shape = 'u32[]', space=smem, size = 0x4, offset = 0x4, fixed_abs, tag = 'smem constant byte address 0x4 - core index']
  #allocation1 [shape = 'u32[144,128]{1,0:T(1,128)}', space=vmem, size = 0x12000, scoped, tag = 'internal scratch']
  #allocation2 [shape = 'f32[1,18,128]{2,1,0:T(8,128)}', space=vmem, size = 0x3000, scoped, tag = 'scratch operand']
  #allocation3 [shape = 'f32[1,18,128]{2,1,0:T(8,128)}', space=vmem, size = 0x3000, scoped, tag = 'scratch operand']
  %s0 = inlined_call_operand.hbm [shape: f32[2,16,128], index: 0, kind: input, shape index: {}]
  %s1 = inlined_call_operand.hbm [shape: bf16[3,128,128], index: 1, kind: input, shape index: {}]
  %s2 = inlined_call_operand.vmem [shape: f32[1,128], index: 2, kind: input, shape index: {}]
  %s3 = inlined_call_operand.hbm [shape: bf16[3,128,128], index: 3, kind: input, shape index: {}]
  %s4 = inlined_call_operand.vmem [shape: f32[1,128], index: 4, kind: input, shape index: {}]
  %s5 = inlined_call_operand.hbm [shape: f32[2,16,128], index: 5, kind: output, shape index: {}]
  %s6 = sld [smem:[#allocation0]]
  $region65: #{tpu_custom_call.1} parent=0
    _
  %s8 = ssub.s32 1, %s6
  %s9 = scalar_select 0, %s8, %s6
  $region1: #{tpu_custom_call.1} parent=0
    #allocation4 [shape = 'u8[16384]{0}', space=vmem, size = 0x4000, scoped, tag = 'input window, operand 0']
    #allocation5 [shape = 's32[2]{0}', space=sflag, size = 0x8, scoped, tag = 'scoped memory for tpu_custom_call.1']
    #allocation6 [shape = 's32[2]{0}', space=sflag, size = 0x8, scoped, tag = 'scoped memory for tpu_custom_call.1']
    #allocation7 [shape = 'u8[98304]{0}', space=vmem, size = 0x18000, scoped, tag = 'input window, operand 1, single buffered']
    #allocation8 [shape = 's32[1]{0}', space=sflag, size = 0x4, scoped, tag = 'scoped memory for tpu_custom_call.1']
    #allocation9 [shape = 'u8[98304]{0}', space=vmem, size = 0x18000, scoped, tag = 'input window, operand 3, single buffered']
    #allocation10 [shape = 'u8[16384]{0}', space=vmem, size = 0x4000, scoped, tag = 'output window, operand 0']
    %10 = vsyncpa [#allocation5], 0
    %s11 = scalar_lea.sflag [#allocation5], 1
    %12 = vsyncpa %s11, 0
    %13 = vsyncpa [#allocation8], 0
    %14 = vsyncpa [#allocation6], 0
    %s15 = scalar_lea.sflag [#allocation6], 1
    %16 = vsyncpa %s15, 0
    loop: start=0, step=1, limit=4
    $region2: #{tpu_custom_call.1} parent=1 // loop_pre_header
      _
    $region3: #{tpu_custom_call.1} parent=1 // loop_header
      %s18 = sphi 0, %s22
      %p19 = scmp.ge.s32.totalorder %s18, 4
      %s28 = sphi 0, %s30
      %s31 = sphi 0, %s28
      %s32 = sphi 0, %s31
      %s48 = sphi 0, %s32
      %s52 = sphi 0, %s52
      %s54 = sphi 0, %s52
      %s55 = sphi 0, %s54
      %s69 = sphi 0, %s55
      %s73 = sphi 0, %s73
      %s75 = sphi 0, %s73
      %s76 = sphi 0, %s75
      %s90 = sphi 0, %s76
      %s94 = sphi 0, %s94
      %s96 = sphi 0, %s94
      %s97 = sphi 0, %s96
      %s111 = sphi 0, %s97
      %s115 = sphi 0, %s115
      %s117 = sphi 0, %s115
      %s118 = sphi 0, %s117
      %s132 = sphi 0, %s118
      %s138 = sphi 0, %s140
      %s141 = sphi 0, %s138
      %s142 = sphi 0, %s141
      %s158 = sphi 0, %s142
    $region4: #{tpu_custom_call.1} parent=1 // loop_header_branch
      %21 = sbr.rel (%p19) target = $region8
    $region5: #{tpu_custom_call.1} parent=1 // loop_body
      %s23 = ssub.s32 %s18, 1
      %s24 = ssub.s32 %s18, 2
      %s25 = sadd.s32 %s18, 1
      %s26 = ssub.s32 %s18, %s25
      %p27 = scmp.eq.s32.totalorder %s26, 0
      %s29 = sadd.s32 %s28, 1
      %s30 = scalar_select %p27, %s28, %s29
      %p33 = pneg %p27
      %p34 = scmp.eq.s32.totalorder %s18, 1
      %p35 = por %p33, %p34
      %p36 = scmp.ne.s32.totalorder %s28, %s31
      %p37 = scmp.eq.s32.totalorder %s18, 0
      %p38 = por %p36, %p37
      %p39 = scmp.ne.s32.totalorder %s28, %s31
      %p40 = scmp.eq.s32.totalorder %s23, 1
      %p41 = por %p39, %p40
      %p42 = scmp.ne.s32.totalorder %s31, %s32
      %p43 = scmp.eq.s32.totalorder %s23, 0
      %p44 = por %p42, %p43
      %p45 = scmp.ne.s32.totalorder %s31, %s32
      %p46 = scmp.eq.s32.totalorder %s24, 1
      %p47 = por %p45, %p46
      %p49 = scmp.ne.s32.totalorder %s32, %s48
      %p50 = scmp.eq.s32.totalorder %s24, 0
      %p51 = por %p49, %p50
      %s53 = sadd.s32 %s52, 1
      %p56 = scmp.eq.s32.totalorder %s18, 1
      %p57 = scmp.ne.s32.totalorder %s52, %s54
      %p58 = scmp.eq.s32.totalorder %s18, 0
      %p59 = por %p57, %p58
      %p60 = scmp.ne.s32.totalorder %s52, %s54
      %p61 = scmp.eq.s32.totalorder %s23, 1
      %p62 = por %p60, %p61
      %p63 = scmp.ne.s32.totalorder %s54, %s55
      %p64 = scmp.eq.s32.totalorder %s23, 0
      %p65 = por %p63, %p64
      %p66 = scmp.ne.s32.totalorder %s54, %s55
      %p67 = scmp.eq.s32.totalorder %s24, 1
      %p68 = por %p66, %p67
      %p70 = scmp.ne.s32.totalorder %s55, %s69
      %p71 = scmp.eq.s32.totalorder %s24, 0
      %p72 = por %p70, %p71
      %s74 = sadd.s32 %s73, 1
      %p77 = scmp.eq.s32.totalorder %s18, 1
      %p78 = scmp.ne.s32.totalorder %s73, %s75
      %p79 = scmp.eq.s32.totalorder %s18, 0
      %p80 = por %p78, %p79
      %p81 = scmp.ne.s32.totalorder %s73, %s75
      %p82 = scmp.eq.s32.totalorder %s23, 1
      %p83 = por %p81, %p82
      %p84 = scmp.ne.s32.totalorder %s75, %s76
      %p85 = scmp.eq.s32.totalorder %s23, 0
      %p86 = por %p84, %p85
      %p87 = scmp.ne.s32.totalorder %s75, %s76
      %p88 = scmp.eq.s32.totalorder %s24, 1
      %p89 = por %p87, %p88
      %p91 = scmp.ne.s32.totalorder %s76, %s90
      %p92 = scmp.eq.s32.totalorder %s24, 0
      %p93 = por %p91, %p92
      %s95 = sadd.s32 %s94, 1
      %p98 = scmp.eq.s32.totalorder %s18, 1
      %p99 = scmp.ne.s32.totalorder %s94, %s96
      %p100 = scmp.eq.s32.totalorder %s18, 0
      %p101 = por %p99, %p100
      %p102 = scmp.ne.s32.totalorder %s94, %s96
      %p103 = scmp.eq.s32.totalorder %s23, 1
      %p104 = por %p102, %p103
      %p105 = scmp.ne.s32.totalorder %s96, %s97
      %p106 = scmp.eq.s32.totalorder %s23, 0
      %p107 = por %p105, %p106
      %p108 = scmp.ne.s32.totalorder %s96, %s97
      %p109 = scmp.eq.s32.totalorder %s24, 1
      %p110 = por %p108, %p109
      %p112 = scmp.ne.s32.totalorder %s97, %s111
      %p113 = scmp.eq.s32.totalorder %s24, 0
      %p114 = por %p112, %p113
      %s116 = sadd.s32 %s115, 1
      %p119 = scmp.eq.s32.totalorder %s18, 1
      %p120 = scmp.ne.s32.totalorder %s115, %s117
      %p121 = scmp.eq.s32.totalorder %s18, 0
      %p122 = por %p120, %p121
      %p123 = scmp.ne.s32.totalorder %s115, %s117
      %p124 = scmp.eq.s32.totalorder %s23, 1
      %p125 = por %p123, %p124
      %p126 = scmp.ne.s32.totalorder %s117, %s118
      %p127 = scmp.eq.s32.totalorder %s23, 0
      %p128 = por %p126, %p127
      %p129 = scmp.ne.s32.totalorder %s117, %s118
      %p130 = scmp.eq.s32.totalorder %s24, 1
      %p131 = por %p129, %p130
      %p133 = scmp.ne.s32.totalorder %s118, %s132
      %p134 = scmp.eq.s32.totalorder %s24, 0
      %p135 = por %p133, %p134
      %s136 = ssub.s32 %s18, %s25
      %p137 = scmp.eq.s32.totalorder %s136, 0
      %s139 = sadd.s32 %s138, 1
      %s140 = scalar_select %p137, %s138, %s139
      %p143 = pneg %p137
      %p144 = scmp.eq.s32.totalorder %s18, 1
      %p145 = por %p143, %p144
      %p146 = scmp.ne.s32.totalorder %s138, %s141
      %p147 = scmp.eq.s32.totalorder %s18, 0
      %p148 = por %p146, %p147
      %p149 = scmp.ne.s32.totalorder %s138, %s141
      %p150 = scmp.eq.s32.totalorder %s23, 1
      %p151 = por %p149, %p150
      %p152 = scmp.ne.s32.totalorder %s141, %s142
      %p153 = scmp.eq.s32.totalorder %s23, 0
      %p154 = por %p152, %p153
      %p155 = scmp.ne.s32.totalorder %s141, %s142
      %p156 = scmp.eq.s32.totalorder %s24, 1
      %p157 = por %p155, %p156
      %p159 = scmp.ne.s32.totalorder %s142, %s158
      %p160 = scmp.eq.s32.totalorder %s24, 0
      %p161 = por %p159, %p160
      %p162 = scmp.le.s32.totalorder 1, %s18
      %p163 = scmp.lt.s32.totalorder %s18, 3
      %p164 = pnand %p162, %p163
      %p165 = pneg %p164
      // Predicated region
      $region9: #{tpu_custom_call.1} parent=5 // pred_check
        _
      $region10: #{tpu_custom_call.1} parent=5 // pred_check_branch
        %167 = sbr.rel (%p164) target = $region12
      $region11: #{tpu_custom_call.1} parent=5 // pred_region
        %s168 = ssub.s32 %s18, 1
        // Predicated region
        $region13: #{tpu_custom_call.1} parent=11 // pred_check
          %p169 = pneg %p65
        $region14: #{tpu_custom_call.1} parent=11 // pred_check_branch
          %171 = sbr.rel (%p169) target = $region16
        $region15: #{tpu_custom_call.1} parent=11 // pred_region
          %s173 = ssub.s32 3072, 3072
          %174 = vsyncadd [#allocation8], %s173
          %s175 = sshll.u32 [#allocation7], 4
          %s176 = int_to_ptr.vmem [resolvable:$true] %s175
          %181 = dma.hbm_to_vmem [thread:$0]  %s1, 3072, %s176, [#allocation8], 64, 64, 4
        $region16: #{tpu_custom_call.1} parent=11 // pred_fallthru
          _
        // Predicated region
        $region17: #{tpu_custom_call.1} parent=11 // pred_check
          %p182 = pneg %p86
        $region18: #{tpu_custom_call.1} parent=11 // pred_check_branch
          %184 = sbr.rel (%p182) target = $region20
        $region19: #{tpu_custom_call.1} parent=11 // pred_region
          _
        $region20: #{tpu_custom_call.1} parent=11 // pred_fallthru
          _
        // Predicated region
        $region21: #{tpu_custom_call.1} parent=11 // pred_check
          %p185 = pneg %p107
        $region22: #{tpu_custom_call.1} parent=11 // pred_check_branch
          %187 = sbr.rel (%p185) target = $region24
        $region23: #{tpu_custom_call.1} parent=11 // pred_region
          %s189 = ssub.s32 3072, 3072
          %190 = vsyncadd [#allocation8], %s189
          %s191 = sshll.u32 [#allocation9], 4
          %s192 = int_to_ptr.vmem [resolvable:$true] %s191
          %197 = dma.hbm_to_vmem [thread:$0]  %s3, 3072, %s192, [#allocation8], 64, 64, 4
        $region24: #{tpu_custom_call.1} parent=11 // pred_fallthru
          _
        // Predicated region
        $region25: #{tpu_custom_call.1} parent=11 // pred_check
          %p198 = pneg %p128
        $region26: #{tpu_custom_call.1} parent=11 // pred_check_branch
          %200 = sbr.rel (%p198) target = $region28
        $region27: #{tpu_custom_call.1} parent=11 // pred_region
          _
        $region28: #{tpu_custom_call.1} parent=11 // pred_fallthru
          _
      $region12: #{tpu_custom_call.1} parent=5 // pred_fallthru
        _
      %p201 = scmp.lt.s32.totalorder %s18, 2
      // Predicated region
      $region29: #{tpu_custom_call.1} parent=5 // pred_check
        %p202 = pneg %p201
      $region30: #{tpu_custom_call.1} parent=5 // pred_check_branch
        %204 = sbr.rel (%p202) target = $region32
      $region31: #{tpu_custom_call.1} parent=5 // pred_region
        // Predicated region
        $region33: #{tpu_custom_call.1} parent=31 // pred_check
          %p205 = pneg %p38
        $region34: #{tpu_custom_call.1} parent=31 // pred_check_branch
          %207 = sbr.rel (%p205) target = $region36
        $region35: #{tpu_custom_call.1} parent=31 // pred_region
          %s208 = sand.u32 %s28, 1
          %s209 = scalar_lea.sflag [#allocation5], %s208
          %s210 = sand.u32 %s28, 1
          %s211 = smul.addr %s210, 16
          %s212 = scalar_lea.vmem [#allocation4], %s211
          %s214 = ssub.s32 256, 256
          %215 = vsyncadd %s209, %s214
          %s216 = smul.addr %s18, 2
          %s217 = smul.addr %s216, 128
          %s218 = scalar_lea.hbm %s0, %s217
          %s219 = sshll.u32 %s212, 4
          %s220 = int_to_ptr.vmem [resolvable:$true] %s219
          %225 = dma.hbm_to_vmem [thread:$0]  %s218, 256, %s220, %s209, 128, 128, 8
        $region36: #{tpu_custom_call.1} parent=31 // pred_fallthru
          _
      $region32: #{tpu_custom_call.1} parent=5 // pred_fallthru
        _
      %p226 = scmp.le.s32.totalorder 1, %s18
      %p227 = scmp.lt.s32.totalorder %s18, 3
      %p228 = pnand %p226, %p227
      %p229 = pneg %p228
      // Predicated region
      $region37: #{tpu_custom_call.1} parent=5 // pred_check
        _
      $region38: #{tpu_custom_call.1} parent=5 // pred_check_branch
        %231 = sbr.rel (%p228) target = $region40
      $region39: #{tpu_custom_call.1} parent=5 // pred_region
        %s232 = ssub.s32 %s18, 1
        %s233 = sand.u32 %s31, 1
        %s234 = scalar_lea.sflag [#allocation5], %s233
        %s235 = sand.u32 %s31, 1
        %s236 = smul.addr %s235, 16
        %s237 = scalar_lea.vmem [#allocation4], %s236
        // Predicated region
        $region41: #{tpu_custom_call.1} parent=39 // pred_check
          %p238 = pneg %p44
        $region42: #{tpu_custom_call.1} parent=39 // pred_check_branch
          %240 = sbr.rel (%p238) target = $region44
        $region43: #{tpu_custom_call.1} parent=39 // pred_region
          %241 = dma.done %s234, 256
        $region44: #{tpu_custom_call.1} parent=39 // pred_fallthru
          _
        // Predicated region
        $region45: #{tpu_custom_call.1} parent=39 // pred_check
          %p242 = pneg %p65
        $region46: #{tpu_custom_call.1} parent=39 // pred_check_branch
          %244 = sbr.rel (%p242) target = $region48
        $region47: #{tpu_custom_call.1} parent=39 // pred_region
          %245 = dma.done [#allocation8], 3072
        $region48: #{tpu_custom_call.1} parent=39 // pred_fallthru
          _
        // Predicated region
        $region49: #{tpu_custom_call.1} parent=39 // pred_check
          %p246 = pneg %p107
        $region50: #{tpu_custom_call.1} parent=39 // pred_check_branch
          %248 = sbr.rel (%p246) target = $region52
        $region51: #{tpu_custom_call.1} parent=39 // pred_region
          %249 = dma.done [#allocation8], 3072
        $region52: #{tpu_custom_call.1} parent=39 // pred_fallthru
          _
        %s250 = sand.u32 %s31, 1
        %s251 = scalar_lea.sflag [#allocation5], %s250
        %s252 = sand.u32 %s31, 1
        %s253 = smul.addr %s252, 16
        %s254 = scalar_lea.vmem [#allocation4], %s253
        %p255 = pneg %p44
        %p256 = pneg %p41
        %p257 = pneg %p65
        %p258 = pneg %p62
        %p259 = pneg %p86
        %p260 = pneg %p83
        %p261 = pneg %p107
        %p262 = pneg %p104
        %p263 = pneg %p128
        %p264 = pneg %p125
        %p265 = pneg %p154
        %p266 = pneg %p151
        %s267 = sand.u32 %s141, 1
        %s268 = scalar_lea.sflag [#allocation6], %s267
        %s269 = sand.u32 %s141, 1
        %s270 = smul.addr %s269, 16
        %s271 = scalar_lea.vmem [#allocation10], %s270
        %v273 = vld [vmem:[%s237] sm:$0xff]
        %v274 = vld [vmem:[%s237 + $0x8] sm:$0xff]
        %275 = vst [vmem:[#allocation2] sm:$0x1] 0.0
        %276 = vst [vmem:[#allocation2 + $0x11] sm:$0x1] 0.0
        %277 = vst [vmem:[#allocation2 + $0x1] sm:$0xff] %v273
        %278 = vst [vmem:[#allocation2 + $0x9] sm:$0xff] %v274
        %v279 = vld [vmem:[#allocation2] sm:$0xff]
        %v280 = vld [vmem:[#allocation2 + $0x8] sm:$0xff]
        %v281 = vpack.c.bf16 %v280, %v279
        %v282 = vld [vmem:[#allocation7] sm:$0xf]
        %v283 = vld [vmem:[#allocation7 + $0x4] sm:$0xf]
        %v284 = vld [vmem:[#allocation7 + $0x8] sm:$0xf]
        %v285 = vld [vmem:[#allocation7 + $0xc] sm:$0xf]
        %v286 = vld [vmem:[#allocation7 + $0x10] sm:$0xf]
        %v287 = vld [vmem:[#allocation7 + $0x14] sm:$0xf]
        %v288 = vld [vmem:[#allocation7 + $0x18] sm:$0xf]
        %v289 = vld [vmem:[#allocation7 + $0x1c] sm:$0xf]
        %v290 = vld [vmem:[#allocation7 + $0x20] sm:$0xf]
        %v291 = vld [vmem:[#allocation7 + $0x24] sm:$0xf]
        %v292 = vld [vmem:[#allocation7 + $0x28] sm:$0xf]
        %v293 = vld [vmem:[#allocation7 + $0x2c] sm:$0xf]
        %v294 = vld [vmem:[#allocation7 + $0x30] sm:$0xf]
        %v295 = vld [vmem:[#allocation7 + $0x34] sm:$0xf]
        %v296 = vld [vmem:[#allocation7 + $0x38] sm:$0xf]
        %v297 = vld [vmem:[#allocation7 + $0x3c] sm:$0xf]
        %v298 = vld [vmem:[#allocation2 + $0x1] sm:$0xff]
        %v299 = vld [vmem:[#allocation2 + $0x9] sm:$0xff]
        %v300 = vpack.c.bf16 %v299, %v298
        %s301 = scalar_lea.vmem [#allocation7], 64
        %v302 = vld [vmem:[%s301] sm:$0xf]
        %v303 = vld [vmem:[%s301 + $0x4] sm:$0xf]
        %v304 = vld [vmem:[%s301 + $0x8] sm:$0xf]
        %v305 = vld [vmem:[%s301 + $0xc] sm:$0xf]
        %v306 = vld [vmem:[%s301 + $0x10] sm:$0xf]
        %v307 = vld [vmem:[%s301 + $0x14] sm:$0xf]
        %v308 = vld [vmem:[%s301 + $0x18] sm:$0xf]
        %v309 = vld [vmem:[%s301 + $0x1c] sm:$0xf]
        %v310 = vld [vmem:[%s301 + $0x20] sm:$0xf]
        %v311 = vld [vmem:[%s301 + $0x24] sm:$0xf]
        %v312 = vld [vmem:[%s301 + $0x28] sm:$0xf]
        %v313 = vld [vmem:[%s301 + $0x2c] sm:$0xf]
        %v314 = vld [vmem:[%s301 + $0x30] sm:$0xf]
        %v315 = vld [vmem:[%s301 + $0x34] sm:$0xf]
        %v316 = vld [vmem:[%s301 + $0x38] sm:$0xf]
        %v317 = vld [vmem:[%s301 + $0x3c] sm:$0xf]
        %v334 = vunpack.c.l.b16 %v302
        %v335 = vunpack.c.l.b16 %v303
        %v336 = vunpack.c.l.b16 %v304
        %v337 = vunpack.c.l.b16 %v305
        %v338 = vunpack.c.l.b16 %v306
        %v339 = vunpack.c.l.b16 %v307
        %v340 = vunpack.c.l.b16 %v308
        %v341 = vunpack.c.l.b16 %v309
        %v342 = vunpack.c.l.b16 %v310
        %v343 = vunpack.c.l.b16 %v311
        %v344 = vunpack.c.l.b16 %v312
        %v345 = vunpack.c.l.b16 %v313
        %v346 = vunpack.c.l.b16 %v314
        %v347 = vunpack.c.l.b16 %v315
        %v348 = vunpack.c.l.b16 %v316
        %v349 = vunpack.c.l.b16 %v317
        %v350 = vpack.c.b16 %v335, %v334
        %v351 = vpack.c.b16 %v337, %v336
        %v352 = vpack.c.b16 %v339, %v338
        %v353 = vpack.c.b16 %v341, %v340
        %v354 = vpack.c.b16 %v343, %v342
        %v355 = vpack.c.b16 %v345, %v344
        %v356 = vpack.c.b16 %v347, %v346
        %v357 = vpack.c.b16 %v349, %v348
        %366 = vmatprep.subr.bf16.mxu0 0
        %367 = vmatpush1.bf16.msra.mxu0 %v357
        %368 = vmatprep.subr.bf16.mxu0 0
        %369 = vmatpush1.bf16.msra.mxu0 %v356
        %370 = vmatprep.subr.bf16.mxu0 0
        %371 = vmatpush1.bf16.msra.mxu0 %v355
        %372 = vmatprep.subr.bf16.mxu0 0
        %373 = vmatpush1.bf16.msra.mxu0 %v354
        %374 = vmatprep.subr.bf16.mxu0 0
        %375 = vmatpush1.bf16.msra.mxu0 %v353
        %376 = vmatprep.subr.bf16.mxu0 0
        %377 = vmatpush1.bf16.msra.mxu0 %v352
        %378 = vmatprep.subr.bf16.mxu0 0
        %379 = vmatpush1.bf16.msra.mxu0 %v351
        %380 = vmatprep.subr.bf16.mxu0 0
        %381 = vmatpush1.bf16.msra.mxu0 %v350
        %382 = vmatprep.subr.bf16.mxu0 0
        %383 = vmatpush2.bf16.msra.mxu0 0
        %384 = vmatprep.subr.bf16.mxu0 0
        %385 = vmatpush2.bf16.msra.mxu0 0
        %386 = vmatprep.subr.bf16.mxu0 0
        %387 = vmatpush2.bf16.msra.mxu0 0
        %388 = vmatprep.subr.bf16.mxu0 0
        %389 = vmatpush2.bf16.msra.mxu0 0
        %390 = vmatprep.subr.bf16.mxu0 0
        %391 = vmatpush2.bf16.msra.mxu0 0
        %392 = vmatprep.subr.bf16.mxu0 0
        %393 = vmatpush2.bf16.msra.mxu0 0
        %394 = vmatprep.subr.bf16.mxu0 0
        %395 = vmatpush2.bf16.msra.mxu0 0
        %396 = vmatprep.subr.bf16.mxu0 0
        %397 = vmatpush2.bf16.msra.mxu0 0
        %398 = vmatprep.mubr.bf16.mxu0 0
        %399 = vmatmul.mubr.bf16.gmra.mxu0 %v300
        %v400 = vpop.f32.mrf.mxu0
        %v401 = vadd.f32 0.0, %v400
        %v402 = vpop.f32.mrf.mxu0
        %v403 = vpop.f32.mrf.mxu0
        %v404 = vadd.f32 0.0, %v403
        %v405 = vpop.f32.mrf.mxu0
        %406 = vdwg.mxu0
        %v423 = vunpack.c.l.b16 %v282
        %v424 = vunpack.c.l.b16 %v283
        %v425 = vunpack.c.l.b16 %v284
        %v426 = vunpack.c.l.b16 %v285
        %v427 = vunpack.c.l.b16 %v286
        %v428 = vunpack.c.l.b16 %v287
        %v429 = vunpack.c.l.b16 %v288
        %v430 = vunpack.c.l.b16 %v289
        %v431 = vunpack.c.l.b16 %v290
        %v432 = vunpack.c.l.b16 %v291
        %v433 = vunpack.c.l.b16 %v292
        %v434 = vunpack.c.l.b16 %v293
        %v435 = vunpack.c.l.b16 %v294
        %v436 = vunpack.c.l.b16 %v295
        %v437 = vunpack.c.l.b16 %v296
        %v438 = vunpack.c.l.b16 %v297
        %v439 = vpack.c.b16 %v424, %v423
        %v440 = vpack.c.b16 %v426, %v425
        %v441 = vpack.c.b16 %v428, %v427
        %v442 = vpack.c.b16 %v430, %v429
        %v443 = vpack.c.b16 %v432, %v431
        %v444 = vpack.c.b16 %v434, %v433
        %v445 = vpack.c.b16 %v436, %v435
        %v446 = vpack.c.b16 %v438, %v437
        %455 = vmatprep.subr.bf16.mxu0 0
        %456 = vmatpush1.bf16.msra.mxu0 %v446
        %457 = vmatprep.subr.bf16.mxu0 0
        %458 = vmatpush1.bf16.msra.mxu0 %v445
        %459 = vmatprep.subr.bf16.mxu0 0
        %460 = vmatpush1.bf16.msra.mxu0 %v444
        %461 = vmatprep.subr.bf16.mxu0 0
        %462 = vmatpush1.bf16.msra.mxu0 %v443
        %463 = vmatprep.subr.bf16.mxu0 0
        %464 = vmatpush1.bf16.msra.mxu0 %v442
        %465 = vmatprep.subr.bf16.mxu0 0
        %466 = vmatpush1.bf16.msra.mxu0 %v441
        %467 = vmatprep.subr.bf16.mxu0 0
        %468 = vmatpush1.bf16.msra.mxu0 %v440
        %469 = vmatprep.subr.bf16.mxu0 0
        %470 = vmatpush1.bf16.msra.mxu0 %v439
        %471 = vmatprep.subr.bf16.mxu0 0
        %472 = vmatpush2.bf16.msra.mxu0 0
        %473 = vmatprep.subr.bf16.mxu0 0
        %474 = vmatpush2.bf16.msra.mxu0 0
        %475 = vmatprep.subr.bf16.mxu0 0
        %476 = vmatpush2.bf16.msra.mxu0 0
        %477 = vmatprep.subr.bf16.mxu0 0
        %478 = vmatpush2.bf16.msra.mxu0 0
        %479 = vmatprep.subr.bf16.mxu0 0
        %480 = vmatpush2.bf16.msra.mxu0 0
        %481 = vmatprep.subr.bf16.mxu0 0
        %482 = vmatpush2.bf16.msra.mxu0 0
        %483 = vmatprep.subr.bf16.mxu0 0
        %484 = vmatpush2.bf16.msra.mxu0 0
        %485 = vmatprep.subr.bf16.mxu0 0
        %486 = vmatpush2.bf16.msra.mxu0 0
        %487 = vmatprep.mubr.bf16.mxu0 0
        %488 = vmatmul.mubr.bf16.gmra.mxu0 %v281
        %v489 = vpop.f32.mrf.mxu0
        %v490 = vadd.f32 %v401, %v489
        %v491 = vpop.f32.mrf.mxu0
        %v492 = vpop.f32.mrf.mxu0
        %v493 = vadd.f32 %v404, %v492
        %v494 = vpop.f32.mrf.mxu0
        %495 = vdwg.mxu0
        %v496 = vld [vmem:[#allocation2 + $0x2] sm:$0xff]
        %v497 = vld [vmem:[#allocation2 + $0xa] sm:$0xff]
        %v498 = vpack.c.bf16 %v497, %v496
        %s499 = scalar_lea.vmem [#allocation7], 128
        %v500 = vld [vmem:[%s499] sm:$0xf]
        %v501 = vld [vmem:[%s499 + $0x4] sm:$0xf]
        %v502 = vld [vmem:[%s499 + $0x8] sm:$0xf]
        %v503 = vld [vmem:[%s499 + $0xc] sm:$0xf]
        %v504 = vld [vmem:[%s499 + $0x10] sm:$0xf]
        %v505 = vld [vmem:[%s499 + $0x14] sm:$0xf]
        %v506 = vld [vmem:[%s499 + $0x18] sm:$0xf]
        %v507 = vld [vmem:[%s499 + $0x1c] sm:$0xf]
        %v508 = vld [vmem:[%s499 + $0x20] sm:$0xf]
        %v509 = vld [vmem:[%s499 + $0x24] sm:$0xf]
        %v510 = vld [vmem:[%s499 + $0x28] sm:$0xf]
        %v511 = vld [vmem:[%s499 + $0x2c] sm:$0xf]
        %v512 = vld [vmem:[%s499 + $0x30] sm:$0xf]
        %v513 = vld [vmem:[%s499 + $0x34] sm:$0xf]
        %v514 = vld [vmem:[%s499 + $0x38] sm:$0xf]
        %v515 = vld [vmem:[%s499 + $0x3c] sm:$0xf]
        %v532 = vunpack.c.l.b16 %v500
        %v533 = vunpack.c.l.b16 %v501
        %v534 = vunpack.c.l.b16 %v502
        %v535 = vunpack.c.l.b16 %v503
        %v536 = vunpack.c.l.b16 %v504
        %v537 = vunpack.c.l.b16 %v505
        %v538 = vunpack.c.l.b16 %v506
        %v539 = vunpack.c.l.b16 %v507
        %v540 = vunpack.c.l.b16 %v508
        %v541 = vunpack.c.l.b16 %v509
        %v542 = vunpack.c.l.b16 %v510
        %v543 = vunpack.c.l.b16 %v511
        %v544 = vunpack.c.l.b16 %v512
        %v545 = vunpack.c.l.b16 %v513
        %v546 = vunpack.c.l.b16 %v514
        %v547 = vunpack.c.l.b16 %v515
        %v548 = vpack.c.b16 %v533, %v532
        %v549 = vpack.c.b16 %v535, %v534
        %v550 = vpack.c.b16 %v537, %v536
        %v551 = vpack.c.b16 %v539, %v538
        %v552 = vpack.c.b16 %v541, %v540
        %v553 = vpack.c.b16 %v543, %v542
        %v554 = vpack.c.b16 %v545, %v544
        %v555 = vpack.c.b16 %v547, %v546
        %564 = vmatprep.subr.bf16.mxu0 0
        %565 = vmatpush1.bf16.msra.mxu0 %v555
        %566 = vmatprep.subr.bf16.mxu0 0
        %567 = vmatpush1.bf16.msra.mxu0 %v554
        %568 = vmatprep.subr.bf16.mxu0 0
        %569 = vmatpush1.bf16.msra.mxu0 %v553
        %570 = vmatprep.subr.bf16.mxu0 0
        %571 = vmatpush1.bf16.msra.mxu0 %v552
        %572 = vmatprep.subr.bf16.mxu0 0
        %573 = vmatpush1.bf16.msra.mxu0 %v551
        %574 = vmatprep.subr.bf16.mxu0 0
        %575 = vmatpush1.bf16.msra.mxu0 %v550
        %576 = vmatprep.subr.bf16.mxu0 0
        %577 = vmatpush1.bf16.msra.mxu0 %v549
        %578 = vmatprep.subr.bf16.mxu0 0
        %579 = vmatpush1.bf16.msra.mxu0 %v548
        %580 = vmatprep.subr.bf16.mxu0 0
        %581 = vmatpush2.bf16.msra.mxu0 0
        %582 = vmatprep.subr.bf16.mxu0 0
        %583 = vmatpush2.bf16.msra.mxu0 0
        %584 = vmatprep.subr.bf16.mxu0 0
        %585 = vmatpush2.bf16.msra.mxu0 0
        %586 = vmatprep.subr.bf16.mxu0 0
        %587 = vmatpush2.bf16.msra.mxu0 0
        %588 = vmatprep.subr.bf16.mxu0 0
        %589 = vmatpush2.bf16.msra.mxu0 0
        %590 = vmatprep.subr.bf16.mxu0 0
        %591 = vmatpush2.bf16.msra.mxu0 0
        %592 = vmatprep.subr.bf16.mxu0 0
        %593 = vmatpush2.bf16.msra.mxu0 0
        %594 = vmatprep.subr.bf16.mxu0 0
        %595 = vmatpush2.bf16.msra.mxu0 0
        %596 = vmatprep.mubr.bf16.mxu0 0
        %597 = vmatmul.mubr.bf16.gmra.mxu0 %v498
        %v598 = vpop.f32.mrf.mxu0
        %v599 = vadd.f32 0.0, %v598
        %v600 = vpop.f32.mrf.mxu0
        %v601 = vpop.f32.mrf.mxu0
        %v602 = vadd.f32 0.0, %v601
        %v603 = vpop.f32.mrf.mxu0
        %604 = vdwg.mxu0
        %v605 = vadd.f32 %v490, %v599
        %v606 = vadd.f32 %v493, %v602
        %v607 = vld [vmem:[%s2] sm:$0x1]
        %v609 = vlaneseq
        %v610 = vshrl.u32 %v609, 7
        %v611 = vsub.s32 0, %v610
        %v612 = vrot.slane %v607, %v611
        %v614 = vadd.f32 %v605, %v612
        %v615 = vadd.f32 %v606, %v612
        %v616 = vmax.f32 %v614, 0.0
        %v617 = vmax.f32 %v615, 0.0
        %618 = vst [vmem:[#allocation3] sm:$0x1] 0.0
        %619 = vst [vmem:[#allocation3 + $0x11] sm:$0x1] 0.0
        %620 = vst [vmem:[#allocation3 + $0x1] sm:$0xff] %v616
        %621 = vst [vmem:[#allocation3 + $0x9] sm:$0xff] %v617
        %v622 = vld [vmem:[#allocation3] sm:$0xff]
        %v623 = vld [vmem:[#allocation3 + $0x8] sm:$0xff]
        %v624 = vpack.c.bf16 %v623, %v622
        %v625 = vld [vmem:[#allocation9] sm:$0xf]
        %v626 = vld [vmem:[#allocation9 + $0x4] sm:$0xf]
        %v627 = vld [vmem:[#allocation9 + $0x8] sm:$0xf]
        %v628 = vld [vmem:[#allocation9 + $0xc] sm:$0xf]
        %v629 = vld [vmem:[#allocation9 + $0x10] sm:$0xf]
        %v630 = vld [vmem:[#allocation9 + $0x14] sm:$0xf]
        %v631 = vld [vmem:[#allocation9 + $0x18] sm:$0xf]
        %v632 = vld [vmem:[#allocation9 + $0x1c] sm:$0xf]
        %v633 = vld [vmem:[#allocation9 + $0x20] sm:$0xf]
        %v634 = vld [vmem:[#allocation9 + $0x24] sm:$0xf]
        %v635 = vld [vmem:[#allocation9 + $0x28] sm:$0xf]
        %v636 = vld [vmem:[#allocation9 + $0x2c] sm:$0xf]
        %v637 = vld [vmem:[#allocation9 + $0x30] sm:$0xf]
        %v638 = vld [vmem:[#allocation9 + $0x34] sm:$0xf]
        %v639 = vld [vmem:[#allocation9 + $0x38] sm:$0xf]
        %v640 = vld [vmem:[#allocation9 + $0x3c] sm:$0xf]
        %v641 = vld [vmem:[#allocation3 + $0x1] sm:$0xff]
        %v642 = vld [vmem:[#allocation3 + $0x9] sm:$0xff]
        %v643 = vpack.c.bf16 %v642, %v641
        %s644 = scalar_lea.vmem [#allocation9], 64
        %v645 = vld [vmem:[%s644] sm:$0xf]
        %v646 = vld [vmem:[%s644 + $0x4] sm:$0xf]
        %v647 = vld [vmem:[%s644 + $0x8] sm:$0xf]
        %v648 = vld [vmem:[%s644 + $0xc] sm:$0xf]
        %v649 = vld [vmem:[%s644 + $0x10] sm:$0xf]
        %v650 = vld [vmem:[%s644 + $0x14] sm:$0xf]
        %v651 = vld [vmem:[%s644 + $0x18] sm:$0xf]
        %v652 = vld [vmem:[%s644 + $0x1c] sm:$0xf]
        %v653 = vld [vmem:[%s644 + $0x20] sm:$0xf]
        %v654 = vld [vmem:[%s644 + $0x24] sm:$0xf]
        %v655 = vld [vmem:[%s644 + $0x28] sm:$0xf]
        %v656 = vld [vmem:[%s644 + $0x2c] sm:$0xf]
        %v657 = vld [vmem:[%s644 + $0x30] sm:$0xf]
        %v658 = vld [vmem:[%s644 + $0x34] sm:$0xf]
        %v659 = vld [vmem:[%s644 + $0x38] sm:$0xf]
        %v660 = vld [vmem:[%s644 + $0x3c] sm:$0xf]
        %v677 = vunpack.c.l.b16 %v645
        %v678 = vunpack.c.l.b16 %v646
        %v679 = vunpack.c.l.b16 %v647
        %v680 = vunpack.c.l.b16 %v648
        %v681 = vunpack.c.l.b16 %v649
        %v682 = vunpack.c.l.b16 %v650
        %v683 = vunpack.c.l.b16 %v651
        %v684 = vunpack.c.l.b16 %v652
        %v685 = vunpack.c.l.b16 %v653
        %v686 = vunpack.c.l.b16 %v654
        %v687 = vunpack.c.l.b16 %v655
        %v688 = vunpack.c.l.b16 %v656
        %v689 = vunpack.c.l.b16 %v657
        %v690 = vunpack.c.l.b16 %v658
        %v691 = vunpack.c.l.b16 %v659
        %v692 = vunpack.c.l.b16 %v660
        %v693 = vpack.c.b16 %v678, %v677
        %v694 = vpack.c.b16 %v680, %v679
        %v695 = vpack.c.b16 %v682, %v681
        %v696 = vpack.c.b16 %v684, %v683
        %v697 = vpack.c.b16 %v686, %v685
        %v698 = vpack.c.b16 %v688, %v687
        %v699 = vpack.c.b16 %v690, %v689
        %v700 = vpack.c.b16 %v692, %v691
        %709 = vmatprep.subr.bf16.mxu0 0
        %710 = vmatpush1.bf16.msra.mxu0 %v700
        %711 = vmatprep.subr.bf16.mxu0 0
        %712 = vmatpush1.bf16.msra.mxu0 %v699
        %713 = vmatprep.subr.bf16.mxu0 0
        %714 = vmatpush1.bf16.msra.mxu0 %v698
        %715 = vmatprep.subr.bf16.mxu0 0
        %716 = vmatpush1.bf16.msra.mxu0 %v697
        %717 = vmatprep.subr.bf16.mxu0 0
        %718 = vmatpush1.bf16.msra.mxu0 %v696
        %719 = vmatprep.subr.bf16.mxu0 0
        %720 = vmatpush1.bf16.msra.mxu0 %v695
        %721 = vmatprep.subr.bf16.mxu0 0
        %722 = vmatpush1.bf16.msra.mxu0 %v694
        %723 = vmatprep.subr.bf16.mxu0 0
        %724 = vmatpush1.bf16.msra.mxu0 %v693
        %725 = vmatprep.subr.bf16.mxu0 0
        %726 = vmatpush2.bf16.msra.mxu0 0
        %727 = vmatprep.subr.bf16.mxu0 0
        %728 = vmatpush2.bf16.msra.mxu0 0
        %729 = vmatprep.subr.bf16.mxu0 0
        %730 = vmatpush2.bf16.msra.mxu0 0
        %731 = vmatprep.subr.bf16.mxu0 0
        %732 = vmatpush2.bf16.msra.mxu0 0
        %733 = vmatprep.subr.bf16.mxu0 0
        %734 = vmatpush2.bf16.msra.mxu0 0
        %735 = vmatprep.subr.bf16.mxu0 0
        %736 = vmatpush2.bf16.msra.mxu0 0
        %737 = vmatprep.subr.bf16.mxu0 0
        %738 = vmatpush2.bf16.msra.mxu0 0
        %739 = vmatprep.subr.bf16.mxu0 0
        %740 = vmatpush2.bf16.msra.mxu0 0
        %741 = vmatprep.mubr.bf16.mxu0 0
        %742 = vmatmul.mubr.bf16.gmra.mxu0 %v643
        %v743 = vpop.f32.mrf.mxu0
        %v744 = vadd.f32 0.0, %v743
        %v745 = vpop.f32.mrf.mxu0
        %v746 = vpop.f32.mrf.mxu0
        %v747 = vadd.f32 0.0, %v746
        %v748 = vpop.f32.mrf.mxu0
        %749 = vdwg.mxu0
        %v766 = vunpack.c.l.b16 %v625
        %v767 = vunpack.c.l.b16 %v626
        %v768 = vunpack.c.l.b16 %v627
        %v769 = vunpack.c.l.b16 %v628
        %v770 = vunpack.c.l.b16 %v629
        %v771 = vunpack.c.l.b16 %v630
        %v772 = vunpack.c.l.b16 %v631
        %v773 = vunpack.c.l.b16 %v632
        %v774 = vunpack.c.l.b16 %v633
        %v775 = vunpack.c.l.b16 %v634
        %v776 = vunpack.c.l.b16 %v635
        %v777 = vunpack.c.l.b16 %v636
        %v778 = vunpack.c.l.b16 %v637
        %v779 = vunpack.c.l.b16 %v638
        %v780 = vunpack.c.l.b16 %v639
        %v781 = vunpack.c.l.b16 %v640
        %v782 = vpack.c.b16 %v767, %v766
        %v783 = vpack.c.b16 %v769, %v768
        %v784 = vpack.c.b16 %v771, %v770
        %v785 = vpack.c.b16 %v773, %v772
        %v786 = vpack.c.b16 %v775, %v774
        %v787 = vpack.c.b16 %v777, %v776
        %v788 = vpack.c.b16 %v779, %v778
        %v789 = vpack.c.b16 %v781, %v780
        %798 = vmatprep.subr.bf16.mxu0 0
        %799 = vmatpush1.bf16.msra.mxu0 %v789
        %800 = vmatprep.subr.bf16.mxu0 0
        %801 = vmatpush1.bf16.msra.mxu0 %v788
        %802 = vmatprep.subr.bf16.mxu0 0
        %803 = vmatpush1.bf16.msra.mxu0 %v787
        %804 = vmatprep.subr.bf16.mxu0 0
        %805 = vmatpush1.bf16.msra.mxu0 %v786
        %806 = vmatprep.subr.bf16.mxu0 0
        %807 = vmatpush1.bf16.msra.mxu0 %v785
        %808 = vmatprep.subr.bf16.mxu0 0
        %809 = vmatpush1.bf16.msra.mxu0 %v784
        %810 = vmatprep.subr.bf16.mxu0 0
        %811 = vmatpush1.bf16.msra.mxu0 %v783
        %812 = vmatprep.subr.bf16.mxu0 0
        %813 = vmatpush1.bf16.msra.mxu0 %v782
        %814 = vmatprep.subr.bf16.mxu0 0
        %815 = vmatpush2.bf16.msra.mxu0 0
        %816 = vmatprep.subr.bf16.mxu0 0
        %817 = vmatpush2.bf16.msra.mxu0 0
        %818 = vmatprep.subr.bf16.mxu0 0
        %819 = vmatpush2.bf16.msra.mxu0 0
        %820 = vmatprep.subr.bf16.mxu0 0
        %821 = vmatpush2.bf16.msra.mxu0 0
        %822 = vmatprep.subr.bf16.mxu0 0
        %823 = vmatpush2.bf16.msra.mxu0 0
        %824 = vmatprep.subr.bf16.mxu0 0
        %825 = vmatpush2.bf16.msra.mxu0 0
        %826 = vmatprep.subr.bf16.mxu0 0
        %827 = vmatpush2.bf16.msra.mxu0 0
        %828 = vmatprep.subr.bf16.mxu0 0
        %829 = vmatpush2.bf16.msra.mxu0 0
        %830 = vmatprep.mubr.bf16.mxu0 0
        %831 = vmatmul.mubr.bf16.gmra.mxu0 %v624
        %v832 = vpop.f32.mrf.mxu0
        %v833 = vadd.f32 %v744, %v832
        %v834 = vpop.f32.mrf.mxu0
        %v835 = vpop.f32.mrf.mxu0
        %v836 = vadd.f32 %v747, %v835
        %v837 = vpop.f32.mrf.mxu0
        %838 = vdwg.mxu0
        %v839 = vld [vmem:[#allocation3 + $0x2] sm:$0xff]
        %v840 = vld [vmem:[#allocation3 + $0xa] sm:$0xff]
        %v841 = vpack.c.bf16 %v840, %v839
        %s842 = scalar_lea.vmem [#allocation9], 128
        %v843 = vld [vmem:[%s842] sm:$0xf]
        %v844 = vld [vmem:[%s842 + $0x4] sm:$0xf]
        %v845 = vld [vmem:[%s842 + $0x8] sm:$0xf]
        %v846 = vld [vmem:[%s842 + $0xc] sm:$0xf]
        %v847 = vld [vmem:[%s842 + $0x10] sm:$0xf]
        %v848 = vld [vmem:[%s842 + $0x14] sm:$0xf]
        %v849 = vld [vmem:[%s842 + $0x18] sm:$0xf]
        %v850 = vld [vmem:[%s842 + $0x1c] sm:$0xf]
        %v851 = vld [vmem:[%s842 + $0x20] sm:$0xf]
        %v852 = vld [vmem:[%s842 + $0x24] sm:$0xf]
        %v853 = vld [vmem:[%s842 + $0x28] sm:$0xf]
        %v854 = vld [vmem:[%s842 + $0x2c] sm:$0xf]
        %v855 = vld [vmem:[%s842 + $0x30] sm:$0xf]
        %v856 = vld [vmem:[%s842 + $0x34] sm:$0xf]
        %v857 = vld [vmem:[%s842 + $0x38] sm:$0xf]
        %v858 = vld [vmem:[%s842 + $0x3c] sm:$0xf]
        %v875 = vunpack.c.l.b16 %v843
        %v876 = vunpack.c.l.b16 %v844
        %v877 = vunpack.c.l.b16 %v845
        %v878 = vunpack.c.l.b16 %v846
        %v879 = vunpack.c.l.b16 %v847
        %v880 = vunpack.c.l.b16 %v848
        %v881 = vunpack.c.l.b16 %v849
        %v882 = vunpack.c.l.b16 %v850
        %v883 = vunpack.c.l.b16 %v851
        %v884 = vunpack.c.l.b16 %v852
        %v885 = vunpack.c.l.b16 %v853
        %v886 = vunpack.c.l.b16 %v854
        %v887 = vunpack.c.l.b16 %v855
        %v888 = vunpack.c.l.b16 %v856
        %v889 = vunpack.c.l.b16 %v857
        %v890 = vunpack.c.l.b16 %v858
        %v891 = vpack.c.b16 %v876, %v875
        %v892 = vpack.c.b16 %v878, %v877
        %v893 = vpack.c.b16 %v880, %v879
        %v894 = vpack.c.b16 %v882, %v881
        %v895 = vpack.c.b16 %v884, %v883
        %v896 = vpack.c.b16 %v886, %v885
        %v897 = vpack.c.b16 %v888, %v887
        %v898 = vpack.c.b16 %v890, %v889
        %907 = vmatprep.subr.bf16.mxu0 0
        %908 = vmatpush1.bf16.msra.mxu0 %v898
        %909 = vmatprep.subr.bf16.mxu0 0
        %910 = vmatpush1.bf16.msra.mxu0 %v897
        %911 = vmatprep.subr.bf16.mxu0 0
        %912 = vmatpush1.bf16.msra.mxu0 %v896
        %913 = vmatprep.subr.bf16.mxu0 0
        %914 = vmatpush1.bf16.msra.mxu0 %v895
        %915 = vmatprep.subr.bf16.mxu0 0
        %916 = vmatpush1.bf16.msra.mxu0 %v894
        %917 = vmatprep.subr.bf16.mxu0 0
        %918 = vmatpush1.bf16.msra.mxu0 %v893
        %919 = vmatprep.subr.bf16.mxu0 0
        %920 = vmatpush1.bf16.msra.mxu0 %v892
        %921 = vmatprep.subr.bf16.mxu0 0
        %922 = vmatpush1.bf16.msra.mxu0 %v891
        %923 = vmatprep.subr.bf16.mxu0 0
        %924 = vmatpush2.bf16.msra.mxu0 0
        %925 = vmatprep.subr.bf16.mxu0 0
        %926 = vmatpush2.bf16.msra.mxu0 0
        %927 = vmatprep.subr.bf16.mxu0 0
        %928 = vmatpush2.bf16.msra.mxu0 0
        %929 = vmatprep.subr.bf16.mxu0 0
        %930 = vmatpush2.bf16.msra.mxu0 0
        %931 = vmatprep.subr.bf16.mxu0 0
        %932 = vmatpush2.bf16.msra.mxu0 0
        %933 = vmatprep.subr.bf16.mxu0 0
        %934 = vmatpush2.bf16.msra.mxu0 0
        %935 = vmatprep.subr.bf16.mxu0 0
        %936 = vmatpush2.bf16.msra.mxu0 0
        %937 = vmatprep.subr.bf16.mxu0 0
        %938 = vmatpush2.bf16.msra.mxu0 0
        %939 = vmatprep.mubr.bf16.mxu0 0
        %940 = vmatmul.mubr.bf16.gmra.mxu0 %v841
        %v941 = vpop.f32.mrf.mxu0
        %v942 = vadd.f32 0.0, %v941
        %v943 = vpop.f32.mrf.mxu0
        %v944 = vpop.f32.mrf.mxu0
        %v945 = vadd.f32 0.0, %v944
        %v946 = vpop.f32.mrf.mxu0
        %947 = vdwg.mxu0
        %v948 = vadd.f32 %v833, %v942
        %v949 = vadd.f32 %v836, %v945
        %v950 = vld [vmem:[%s4] sm:$0x1]
        %v952 = vlaneseq
        %v953 = vshrl.u32 %v952, 7
        %v954 = vsub.s32 0, %v953
        %v955 = vrot.slane %v950, %v954
        %v957 = vadd.f32 %v948, %v955
        %v958 = vadd.f32 %v949, %v955
        %v959 = vadd.f32 %v957, %v273
        %v960 = vadd.f32 %v958, %v274
        %v961 = vmax.f32 %v959, 0.0
        %v962 = vmax.f32 %v960, 0.0
        %963 = vst [vmem:[%s271] sm:$0xff] %v961
        %964 = vst [vmem:[%s271 + $0x8] sm:$0xff] %v962
        %s965 = sand.u32 %s141, 1
        %s966 = scalar_lea.sflag [#allocation6], %s965
        %s967 = sand.u32 %s141, 1
        %s968 = smul.addr %s967, 16
        %s969 = scalar_lea.vmem [#allocation10], %s968
        // Predicated region
        $region53: #{tpu_custom_call.1} parent=39 // pred_check
          %p970 = pneg %p151
        $region54: #{tpu_custom_call.1} parent=39 // pred_check_branch
          %972 = sbr.rel (%p970) target = $region56
        $region55: #{tpu_custom_call.1} parent=39 // pred_region
          %s974 = ssub.s32 256, 256
          %975 = vsyncadd %s966, %s974
          %s976 = smul.addr %s23, 2
          %s977 = smul.addr %s976, 128
          %s978 = scalar_lea.hbm %s5, %s977
          %s979 = sshll.u32 %s969, 4
          %s980 = int_to_ptr.vmem [resolvable:$true] %s979
          %985 = dma.vmem_to_hbm [thread:$0]  %s980, 256, %s978, %s966, 128, 128, 8
        $region56: #{tpu_custom_call.1} parent=39 // pred_fallthru
          _
      $region40: #{tpu_custom_call.1} parent=5 // pred_fallthru
        _
      %p986 = scmp.le.s32.totalorder 2, %s18
      // Predicated region
      $region57: #{tpu_custom_call.1} parent=5 // pred_check
        %p987 = pneg %p986
      $region58: #{tpu_custom_call.1} parent=5 // pred_check_branch
        %989 = sbr.rel (%p987) target = $region60
      $region59: #{tpu_custom_call.1} parent=5 // pred_region
        %s990 = ssub.s32 %s18, 2
        // Predicated region
        $region61: #{tpu_custom_call.1} parent=59 // pred_check
          %p991 = pneg %p157
        $region62: #{tpu_custom_call.1} parent=59 // pred_check_branch
          %993 = sbr.rel (%p991) target = $region64
        $region63: #{tpu_custom_call.1} parent=59 // pred_region
          %s994 = sand.u32 %s142, 1
          %s995 = scalar_lea.sflag [#allocation6], %s994
          %s996 = sand.u32 %s142, 1
          %s997 = smul.addr %s996, 16
          %s998 = scalar_lea.vmem [#allocation10], %s997
          %999 = dma.done %s995, 256
        $region64: #{tpu_custom_call.1} parent=59 // pred_fallthru
          _
      $region60: #{tpu_custom_call.1} parent=5 // pred_fallthru
        _
    $region6: #{tpu_custom_call.1} parent=1 // loop_footer
      %s22 = sadd.s32 1, %s18
    $region7: #{tpu_custom_call.1} parent=1 // loop_footer_branch
      %17 = sbr.rel target = $region3
    $region8: #{tpu_custom_call.1} parent=1 // loop_exit
      _
    %1000 = vsyncpa [#allocation5], 1
    %s1001 = scalar_lea.sflag [#allocation5], 1
    %1002 = vsyncpa %s1001, 1
    %1003 = vsyncpa [#allocation8], 1
    %1004 = vsyncpa [#allocation6], 1
    %s1005 = scalar_lea.sflag [#allocation6], 1
    %1006 = vsyncpa %s1005, 1

</llo_original>
